<compile_context>
chip_gen: v5e
topology: v5e:2x2
jax: 0.10.0
libtpu: 0.0.40
codegen_flags: <defaults>
</compile_context>

<pallas_src>
import math

import jax
import jax.numpy as jnp
from jax.experimental import pallas as pl
from jax.experimental.pallas import tpu as pltpu


def _linear_bias_kernel(x_ref, qt_ref, b_ref, o_ref):
    # out = x @ q_t + bias   (q_t == Q^T, so this is F.linear(x, Q, bias))
    acc = jnp.dot(x_ref[...], qt_ref[...], preferred_element_type=jnp.float32)
    o_ref[...] = (acc + b_ref[...]).astype(o_ref.dtype)


def _linear_nobias_kernel(x_ref, qt_ref, o_ref):
    acc = jnp.dot(x_ref[...], qt_ref[...], preferred_element_type=jnp.float32)
    o_ref[...] = acc.astype(o_ref.dtype)


def _round_up(v, m):
    return ((v + m - 1) // m) * m


def orthogonal_forward(x, q_params, bias=None, *, tile_b=512):
    """Pallas implementation of Orthogonal.forward.

    x:        (..., n) float32
    q_params: (n, n)   float32 (raw parameters; only strict upper triangle is used)
    bias:     (n,)     float32 or None
    """
    n = q_params.shape[0]
    orig_shape = x.shape
    x2 = x.reshape(-1, n)
    B = x2.shape[0]
    dtype = x2.dtype

    # --- parameter setup (one-time glue, plain JAX) ---
    triu = jnp.triu(q_params, k=1)
    # Q   = expm(triu - triu^T); since the generator is skew-symmetric,
    # Q^T = expm(triu^T - triu)  -> compute the transposed factor directly.
    q_t = jax.scipy.linalg.expm(triu.T - triu).astype(dtype)

    # --- lane-dense padding of the feature dim (multiple of 128) ---
    n_pad = _round_up(n, 128)
    # --- batch tiling: multiple of 8 sublanes, capped at tile_b ---
    tile_b = max(8, (tile_b // 8) * 8)
    TILE_B = min(tile_b, _round_up(B, 8))
    B_pad = _round_up(B, TILE_B)

    x_p = jnp.zeros((B_pad, n_pad), dtype=dtype).at[:B, :n].set(x2)
    qt_p = jnp.zeros((n_pad, n_pad), dtype=dtype).at[:n, :n].set(q_t)

    grid = (B_pad // TILE_B,)

    # VMEM budget: 2x double-buffered x, 2x double-buffered out, resident q_t + bias.
    itemsize = jnp.dtype(dtype).itemsize
    vmem_needed = (
        2 * TILE_B * n_pad * itemsize      # x (double-buffered)
        + 2 * TILE_B * n_pad * itemsize    # out (double-buffered)
        + n_pad * n_pad * itemsize         # q_t (resident)
        + n_pad * itemsize                 # bias (resident)
    )
    vmem_limit = int(min(48 * 1024 * 1024, max(4 * 1024 * 1024, 2 * vmem_needed)))

    compiler_params = pltpu.CompilerParams(
        dimension_semantics=("parallel",),   # v7x: split batch tiles across both TCs
        vmem_limit_bytes=vmem_limit,
    )

    x_spec = pl.BlockSpec((TILE_B, n_pad), lambda i: (i, 0))
    qt_spec = pl.BlockSpec((n_pad, n_pad), lambda i: (0, 0))
    out_spec = pl.BlockSpec((TILE_B, n_pad), lambda i: (i, 0))
    out_shape = jax.ShapeDtypeStruct((B_pad, n_pad), dtype)

    if bias is not None:
        b_p = jnp.zeros((1, n_pad), dtype=dtype).at[0, :n].set(bias.astype(dtype))
        b_spec = pl.BlockSpec((1, n_pad), lambda i: (0, 0))
        out_p = pl.pallas_call(
            _linear_bias_kernel,
            out_shape=out_shape,
            grid=grid,
            in_specs=[x_spec, qt_spec, b_spec],
            out_specs=out_spec,
            compiler_params=compiler_params,
        )(x_p, qt_p, b_p)
    else:
        out_p = pl.pallas_call(
            _linear_nobias_kernel,
            out_shape=out_shape,
            grid=grid,
            in_specs=[x_spec, qt_spec],
            out_specs=out_spec,
            compiler_params=compiler_params,
        )(x_p, qt_p)

    return out_p[:B, :n].reshape(orig_shape)


def init_orthogonal_params(key, n):
    """Deterministic re-implementation of Orthogonal.reset_parameters."""
    k1, k2 = jax.random.split(key)
    q_params = jax.random.uniform(
        k1, (n, n), dtype=jnp.float32, minval=-math.pi, maxval=math.pi
    )
    q_params = jnp.triu(q_params, k=1)
    # fan_in of an (n, n) weight is n
    bound = 1.0 / math.sqrt(n)
    bias = jax.random.uniform(
        k2, (n,), dtype=jnp.float32, minval=-bound, maxval=bound
    )
    return q_params, bias


if __name__ == "__main__":
    key = jax.random.PRNGKey(0)
    k_param, k_x = jax.random.split(key)

    n = 32
    batch = 8

    q_params, bias = init_orthogonal_params(k_param, n)
    x = jax.random.normal(k_x, (batch, n), dtype=jnp.float32)

    # Pure-JAX reference.
    triu = jnp.triu(q_params, k=1)
    q_ref = jax.scipy.linalg.expm(triu - triu.T)
    ref_bias = x @ q_ref.T + bias
    ref_nobias = x @ q_ref.T

    # With bias.
    out = jax.block_until_ready(orthogonal_forward(x, q_params, bias))
    assert out.shape == (batch, n)
    assert jnp.allclose(out, ref_bias, atol=1e-5, rtol=1e-5), "mismatch vs reference (bias)"

    # Without bias (exercises the bias-free kernel variant).
    out_nb = jax.block_until_ready(orthogonal_forward(x, q_params, None))
    assert out_nb.shape == (batch, n)
    assert jnp.allclose(out_nb, ref_nobias, atol=1e-5, rtol=1e-5), "mismatch vs reference (no bias)"

    print("KERNEL_OK")
</pallas_src>

<mosaic_0001>
module attributes {stable_mosaic.version = 11 : i64} {
  func.func @_linear_bias_kernel(%arg0: i32, %arg1: memref<8x128xf32, #tpu.memory_space<vmem>>, %arg2: memref<128x128xf32, #tpu.memory_space<vmem>>, %arg3: memref<1x128xf32, #tpu.memory_space<vmem>>, %arg4: memref<8x128xf32, #tpu.memory_space<vmem>>) attributes {dimension_semantics = [#tpu.dimension_semantics<parallel>], iteration_bounds = array<i64: 1>, scalar_prefetch = 0 : i64, scratch_operands = 0 : i64, tpu.core_type = #tpu.core_type<tc>, window_params = [{transform_indices = @transform_0, window_bounds = array<i64: 8, 128>}, {pipeline_mode = #tpu.pipeline_mode<synchronous>, transform_indices = @transform_1, window_bounds = array<i64: 128, 128>}, {pipeline_mode = #tpu.pipeline_mode<synchronous>, transform_indices = @transform_2, window_bounds = array<i64: 1, 128>}, {transform_indices = @transform_3, window_bounds = array<i64: 8, 128>}]} {
    %c0 = arith.constant 0 : index
    %c0_0 = arith.constant 0 : index
    %0 = vector.load %arg1[%c0, %c0_0] : memref<8x128xf32, #tpu.memory_space<vmem>>, vector<8x128xf32>
    %c0_1 = arith.constant 0 : index
    %c0_2 = arith.constant 0 : index
    %1 = vector.load %arg2[%c0_1, %c0_2] : memref<128x128xf32, #tpu.memory_space<vmem>>, vector<128x128xf32>
    %cst = arith.constant dense<0.000000e+00> : vector<8x128xf32>
    %2 = tpu.matmul %0, %1, %cst {dimension_numbers = #tpu.dot_dimension_numbers<[1], [0], [0], [1], [0, 0, 1, 1], [], []>} : vector<8x128xf32>, vector<128x128xf32>, vector<8x128xf32> -> vector<8x128xf32>
    %c0_3 = arith.constant 0 : index
    %c0_4 = arith.constant 0 : index
    %3 = vector.load %arg3[%c0_3, %c0_4] : memref<1x128xf32, #tpu.memory_space<vmem>>, vector<1x128xf32>
    %4 = vector.broadcast %3 : vector<1x128xf32> to vector<8x128xf32>
    %5 = arith.addf %2, %4 : vector<8x128xf32>
    %c0_5 = arith.constant 0 : index
    %c0_6 = arith.constant 0 : index
    %6 = vector.load %arg4[%c0_5, %c0_6] : memref<8x128xf32, #tpu.memory_space<vmem>>, vector<8x128xf32>
    tpu.vector_store %arg4[%c0_5, %c0_6], %5 {strides = array<i32>} : memref<8x128xf32, #tpu.memory_space<vmem>>, vector<8x128xf32>,
    return
  }
  func.func @transform_0(%arg0: i32) -> (i32, i32) {
    %c0_i32 = arith.constant 0 : i32
    %c0_i32_0 = arith.constant 0 : i32
    return %arg0, %c0_i32 : i32, i32
  }
  func.func @transform_1(%arg0: i32) -> (i32, i32) {
    %c0_i32 = arith.constant 0 : i32
    %c0_i32_0 = arith.constant 0 : i32
    %c0_i32_1 = arith.constant 0 : i32
    return %c0_i32, %c0_i32_0 : i32, i32
  }
  func.func @transform_2(%arg0: i32) -> (i32, i32) {
    %c0_i32 = arith.constant 0 : i32
    %c0_i32_0 = arith.constant 0 : i32
    %c0_i32_1 = arith.constant 0 : i32
    return %c0_i32, %c0_i32_0 : i32, i32
  }
  func.func @transform_3(%arg0: i32) -> (i32, i32) {
    %c0_i32 = arith.constant 0 : i32
    %c0_i32_0 = arith.constant 0 : i32
    return %arg0, %c0_i32 : i32, i32
  }
}

</mosaic_0001>

<llo_original>
// kernel: tpu_custom_call.1
$region0: #{tpu_custom_call.1}
  #allocation0 [shape = 'u32[]', space=smem, size = 0x4, offset = 0x4, fixed_abs, tag = 'smem constant byte address 0x4 - core index']
  #allocation1 [shape = 'u32[72,128]{1,0:T(1,128)}', space=vmem, size = 0x9000, scoped, tag = 'internal scratch']
  %s0 = inlined_call_operand.hbm [shape: f32[8,128], index: 0, kind: input, shape index: {}]
  %s1 = inlined_call_operand.hbm [shape: f32[128,128], index: 1, kind: input, shape index: {}]
  %s2 = inlined_call_operand.vmem [shape: f32[1,128], index: 2, kind: input, shape index: {}]
  %s3 = inlined_call_operand.hbm [shape: f32[8,128], index: 3, kind: output, shape index: {}]
  %s4 = sld [smem:[#allocation0]]
  $region30: #{tpu_custom_call.1} parent=0
    _
  %s6 = ssub.s32 1, %s4
  %s7 = scalar_select 0, %s6, %s4
  $region1: #{tpu_custom_call.1} parent=0
    #allocation2 [shape = 'u8[4096]{0}', space=vmem, size = 0x1000, scoped, tag = 'input window, operand 0, single buffered']
    #allocation3 [shape = 's32[1]{0}', space=sflag, size = 0x4, scoped, tag = 'scoped memory for tpu_custom_call.1']
    #allocation4 [shape = 's32[1]{0}', space=sflag, size = 0x4, scoped, tag = 'scoped memory for tpu_custom_call.1']
    #allocation5 [shape = 'u8[65536]{0}', space=vmem, size = 0x10000, scoped, tag = 'input window, operand 1, single buffered']
    #allocation6 [shape = 's32[1]{0}', space=sflag, size = 0x4, scoped, tag = 'scoped memory for tpu_custom_call.1']
    #allocation7 [shape = 'u8[4096]{0}', space=vmem, size = 0x1000, scoped, tag = 'output window, operand 0, single buffered']
    %8 = vsyncpa [#allocation3], 0
    %9 = vsyncpa [#allocation6], 0
    %10 = vsyncpa [#allocation4], 0
    // Predicated region
    $region2: #{tpu_custom_call.1} parent=1 // pred_check
      _
    $region3: #{tpu_custom_call.1} parent=1 // pred_check_branch
      %12 = sbr.rel (0) target = $region5
    $region4: #{tpu_custom_call.1} parent=1 // pred_region
      %14 = vsyncadd [#allocation3], 0
      %s16 = sshll.u32 %s0, 4
      %s17 = int_to_ptr.hbm [resolvable:$true] %s16
      %s18 = sshll.u32 [#allocation2], 4
      %s19 = int_to_ptr.vmem [resolvable:$true] %s18
      %21 = dma.hbm_to_vmem [thread:$0]  %s17, 128, %s19, [#allocation3]
    $region5: #{tpu_custom_call.1} parent=1 // pred_fallthru
      _
    // Predicated region
    $region6: #{tpu_custom_call.1} parent=1 // pred_check
      _
    $region7: #{tpu_custom_call.1} parent=1 // pred_check_branch
      %23 = sbr.rel (0) target = $region9
    $region8: #{tpu_custom_call.1} parent=1 // pred_region
      %25 = vsyncadd [#allocation6], 0
      %s26 = sshll.u32 %s1, 4
      %s27 = int_to_ptr.hbm [resolvable:$true] %s26
      %s28 = sshll.u32 [#allocation5], 4
      %s29 = int_to_ptr.vmem [resolvable:$true] %s28
      %34 = dma.hbm_to_vmem [thread:$0]  %s27, 2048, %s29, [#allocation6], 128, 128, 8
    $region9: #{tpu_custom_call.1} parent=1 // pred_fallthru
      _
    // Predicated region
    $region10: #{tpu_custom_call.1} parent=1 // pred_check
      _
    $region11: #{tpu_custom_call.1} parent=1 // pred_check_branch
      %36 = sbr.rel (0) target = $region13
    $region12: #{tpu_custom_call.1} parent=1 // pred_region
      _
    $region13: #{tpu_custom_call.1} parent=1 // pred_fallthru
      _
    // Predicated region
    $region14: #{tpu_custom_call.1} parent=1 // pred_check
      _
    $region15: #{tpu_custom_call.1} parent=1 // pred_check_branch
      %38 = sbr.rel (0) target = $region17
    $region16: #{tpu_custom_call.1} parent=1 // pred_region
      %40 = dma.done [#allocation3], 128
    $region17: #{tpu_custom_call.1} parent=1 // pred_fallthru
      _
    // Predicated region
    $region18: #{tpu_custom_call.1} parent=1 // pred_check
      _
    $region19: #{tpu_custom_call.1} parent=1 // pred_check_branch
      %42 = sbr.rel (0) target = $region21
    $region20: #{tpu_custom_call.1} parent=1 // pred_region
      %44 = dma.done [#allocation6], 2048
    $region21: #{tpu_custom_call.1} parent=1 // pred_fallthru
      _
    %v45 = vld [vmem:[#allocation2] sm:$0xff]
    %v46 = vld [vmem:[#allocation5] sm:$0xff]
    %v47 = vld [vmem:[#allocation5 + $0x8] sm:$0xff]
    %v48 = vld [vmem:[#allocation5 + $0x10] sm:$0xff]
    %v49 = vld [vmem:[#allocation5 + $0x18] sm:$0xff]
    %v50 = vld [vmem:[#allocation5 + $0x20] sm:$0xff]
    %v51 = vld [vmem:[#allocation5 + $0x28] sm:$0xff]
    %v52 = vld [vmem:[#allocation5 + $0x30] sm:$0xff]
    %v53 = vld [vmem:[#allocation5 + $0x38] sm:$0xff]
    %v54 = vld [vmem:[#allocation5 + $0x40] sm:$0xff]
    %v55 = vld [vmem:[#allocation5 + $0x48] sm:$0xff]
    %v56 = vld [vmem:[#allocation5 + $0x50] sm:$0xff]
    %v57 = vld [vmem:[#allocation5 + $0x58] sm:$0xff]
    %v58 = vld [vmem:[#allocation5 + $0x60] sm:$0xff]
    %v59 = vld [vmem:[#allocation5 + $0x68] sm:$0xff]
    %v60 = vld [vmem:[#allocation5 + $0x70] sm:$0xff]
    %v61 = vld [vmem:[#allocation5 + $0x78] sm:$0xff]
    %v62 = vld [vmem:[%s2] sm:$0x1]
    %v64 = vperm.slane %v62, 0
    %66 = vmatpush.msra.mxu0 %v61
    %67 = vmatpush.msra.mxu0 %v60
    %68 = vmatpush.msra.mxu0 %v59
    %69 = vmatpush.msra.mxu0 %v58
    %70 = vmatpush.msra.mxu0 %v57
    %71 = vmatpush.msra.mxu0 %v56
    %72 = vmatpush.msra.mxu0 %v55
    %73 = vmatpush.msra.mxu0 %v54
    %74 = vmatpush.msra.mxu0 %v53
    %75 = vmatpush.msra.mxu0 %v52
    %76 = vmatpush.msra.mxu0 %v51
    %77 = vmatpush.msra.mxu0 %v50
    %78 = vmatpush.msra.mxu0 %v49
    %79 = vmatpush.msra.mxu0 %v48
    %80 = vmatpush.msra.mxu0 %v47
    %81 = vmatpush.msra.mxu0 %v46
    %82 = vmatmul.f32.gmra.mxu0 %v45
    %v83 = vpop.f32.mrf.mxu0
    %v84 = vadd.f32 %v64, %v83
    %85 = vdwg.mxu0
    %86 = vst [vmem:[#allocation7] sm:$0xff] %v84
    // Predicated region
    $region22: #{tpu_custom_call.1} parent=1 // pred_check
      _
    $region23: #{tpu_custom_call.1} parent=1 // pred_check_branch
      %88 = sbr.rel (0) target = $region25
    $region24: #{tpu_custom_call.1} parent=1 // pred_region
      %90 = vsyncadd [#allocation4], 0
      %s92 = sshll.u32 [#allocation7], 4
      %s93 = int_to_ptr.vmem [resolvable:$true] %s92
      %s94 = sshll.u32 %s3, 4
      %s95 = int_to_ptr.hbm [resolvable:$true] %s94
      %97 = dma.vmem_to_hbm [thread:$0]  %s93, 128, %s95, [#allocation4]
    $region25: #{tpu_custom_call.1} parent=1 // pred_fallthru
      _
    // Predicated region
    $region26: #{tpu_custom_call.1} parent=1 // pred_check
      _
    $region27: #{tpu_custom_call.1} parent=1 // pred_check_branch
      %99 = sbr.rel (0) target = $region29
    $region28: #{tpu_custom_call.1} parent=1 // pred_region
      %101 = dma.done [#allocation4], 128
    $region29: #{tpu_custom_call.1} parent=1 // pred_fallthru
      _
    %102 = vsyncpa [#allocation3], 1
    %103 = vsyncpa [#allocation6], 1
    %104 = vsyncpa [#allocation4], 1

</llo_original>
